<compile_context>
chip_gen: v7x
topology: tpu7x:2x2x1
jax: 0.10.0
libtpu: 0.0.40
codegen_flags: <defaults>
</compile_context>

<pallas_src>
from functools import partial

import jax
import jax.numpy as jnp
from jax.experimental import pallas as pl
from jax.experimental.pallas import tpu as pltpu


_COLS = 1024                      # lane-dense last dim (multiple of 128)
_ROW_TILE = 256                   # 256 * 1024 * 4B = 1 MiB f32 per tile
_VMEM_LIMIT = 32 * 1024 * 1024    # headroom for 2x input + 2x output buffers


# ----------------------------- kernels --------------------------------------

def _centered_one_block_kernel(x_ref, o_ref, *, inv_n):
    """Fused path: whole (padded) array in one VMEM block."""
    x = x_ref[...]
    total = jnp.sum(x, dtype=jnp.float32)          # f32 accumulation
    mean = (total * inv_n).astype(x.dtype)         # static reciprocal, cast once
    o_ref[...] = x - mean                          # subtract in input dtype


def _partial_sum_kernel(x_ref, acc_ref):
    """Pass 1: accumulate per-lane partial sums (f32) across the row-tile grid."""
    @pl.when(pl.program_id(0) == 0)
    def _init():
        acc_ref[...] = jnp.zeros_like(acc_ref)
    acc_ref[...] += jnp.sum(x_ref[...], axis=0, keepdims=True, dtype=jnp.float32)


def _subtract_mean_kernel(mean_ref, x_ref, o_ref):
    """Pass 2: tiled elementwise subtract; mean arrives as an SMEM scalar."""
    x = x_ref[...]
    o_ref[...] = x - mean_ref[0, 0].astype(x.dtype)


# ----------------------------- wrapper ---------------------------------------

def _pack_2d(x: jax.Array):
    """Flatten to a lane-dense, tile-aligned 2D layout (zero padded)."""
    n = x.size
    cols = _COLS if n >= _COLS else 128
    rows = -(-n // cols)                                    # ceil div
    row_tile = min(_ROW_TILE, max(8, ((rows + 7) // 8) * 8))
    rows_p = ((rows + row_tile - 1) // row_tile) * row_tile
    pad = rows_p * cols - n
    flat = x.reshape(-1)
    if pad:
        flat = jnp.pad(flat, (0, pad))                      # zeros: sum-neutral
    return flat.reshape(rows_p, cols), row_tile, cols, pad


def centered_layer(x: jax.Array) -> jax.Array:
    """Pallas implementation of CenteredLayer.forward: x - x.mean() (global mean)."""
    orig_shape = x.shape
    n = x.size
    x2, row_tile, cols, pad = _pack_2d(x)
    rows_p = x2.shape[0]
    num_tiles = rows_p // row_tile
    inv_n = 1.0 / n

    if num_tiles == 1:
        # Small input: single fused block (<= 1 MiB), one pallas_call.
        y2 = pl.pallas_call(
            partial(_centered_one_block_kernel, inv_n=inv_n),
            out_shape=jax.ShapeDtypeStruct(x2.shape, x.dtype),
            in_specs=[pl.BlockSpec(x2.shape, lambda: (0, 0))],
            out_specs=pl.BlockSpec(x2.shape, lambda: (0, 0)),
        )(x2)
    else:
        # Pass 1: grid reduction -> (1, cols) f32 per-lane partial sums.
        partial_sums = pl.pallas_call(
            _partial_sum_kernel,
            out_shape=jax.ShapeDtypeStruct((1, cols), jnp.float32),
            grid=(num_tiles,),
            in_specs=[pl.BlockSpec((row_tile, cols), lambda i: (i, 0))],
            out_specs=pl.BlockSpec((1, cols), lambda i: (0, 0)),
            compiler_params=pltpu.CompilerParams(
                dimension_semantics=("arbitrary",),
                vmem_limit_bytes=_VMEM_LIMIT),
        )(x2)
        # Tiny final lane reduction + static-reciprocal divide (true N, not padded N).
        mean = (jnp.sum(partial_sums) * inv_n).astype(jnp.float32).reshape(1, 1)

        # Pass 2: tiled lane-dense subtract; spatial axis parallel across TCs.
        y2 = pl.pallas_call(
            _subtract_mean_kernel,
            out_shape=jax.ShapeDtypeStruct(x2.shape, x.dtype),
            grid=(num_tiles,),
            in_specs=[
                pl.BlockSpec(memory_space=pltpu.MemorySpace.SMEM),   # mean scalar
                pl.BlockSpec((row_tile, cols), lambda i: (i, 0)),
            ],
            out_specs=pl.BlockSpec((row_tile, cols), lambda i: (i, 0)),
            compiler_params=pltpu.CompilerParams(
                dimension_semantics=("parallel",),
                vmem_limit_bytes=_VMEM_LIMIT),
        )(mean, x2)

    if pad:
        return y2.reshape(-1)[:n].reshape(orig_shape)
    return y2.reshape(orig_shape)


# ----------------------------- test ------------------------------------------

if __name__ == "__main__":
    key = jax.random.PRNGKey(0)
    k1, k2 = jax.random.split(key)

    # Small shape consistent with the module (batch=2, hidden=32): fused path.
    x_small = jax.random.normal(k1, (2, 32), dtype=jnp.float32)
    out_small = centered_layer(x_small)
    jax.block_until_ready(out_small)
    ref_small = x_small - jnp.mean(x_small)
    assert out_small.shape == x_small.shape and out_small.dtype == x_small.dtype
    assert jnp.allclose(out_small, ref_small, atol=1e-6, rtol=1e-6)
    assert abs(float(jnp.mean(out_small))) < 1e-5

    # Larger, non-tile-multiple shape: exercises the two-pass tiled path + padding.
    x_large = jax.random.normal(k2, (600, 1000), dtype=jnp.float32)
    out_large = centered_layer(x_large)
    jax.block_until_ready(out_large)
    ref_large = x_large - jnp.mean(x_large)
    assert out_large.shape == x_large.shape and out_large.dtype == x_large.dtype
    assert jnp.allclose(out_large, ref_large, atol=1e-5, rtol=1e-5)
    assert abs(float(jnp.mean(out_large))) < 1e-5

    print("KERNEL_OK")
</pallas_src>

<mosaic_0001>
module attributes {stable_mosaic.version = 11 : i64} {
  func.func @_centered_one_block_kernel(%arg0: memref<8x128xf32, #tpu.memory_space<vmem>>, %arg1: memref<8x128xf32, #tpu.memory_space<vmem>>) attributes {dimension_semantics = [], scalar_prefetch = 0 : i64, scratch_operands = 0 : i64, tpu.core_type = #tpu.core_type<tc>} {
    %c0 = arith.constant 0 : index
    %c0_0 = arith.constant 0 : index
    %0 = vector.load %arg0[%c0, %c0_0] : memref<8x128xf32, #tpu.memory_space<vmem>>, vector<8x128xf32>
    %1 = vector.shape_cast %0 : vector<8x128xf32> to vector<1x8x128xf32>
    %cst = arith.constant dense<0.000000e+00> : vector<1xf32>
    %2 = vector.multi_reduction <add>, %1, %cst [1, 2] : vector<1x8x128xf32> to vector<1xf32>
    %3 = vector.shape_cast %2 : vector<1xf32> to vector<1x1x1xf32>
    %4 = vector.extract %3[0, 0, 0] : f32 from vector<1x1x1xf32>
    %cst_1 = arith.constant 1.562500e-02 : f32
    %5 = arith.mulf %4, %cst_1 : f32
    %6 = vector.broadcast %5 : f32 to vector<8x128xf32>
    %7 = arith.subf %0, %6 : vector<8x128xf32>
    %c0_2 = arith.constant 0 : index
    %c0_3 = arith.constant 0 : index
    %8 = vector.load %arg1[%c0_2, %c0_3] : memref<8x128xf32, #tpu.memory_space<vmem>>, vector<8x128xf32>
    tpu.vector_store %arg1[%c0_2, %c0_3], %7 {strides = array<i32>} : memref<8x128xf32, #tpu.memory_space<vmem>>, vector<8x128xf32>,
    return
  }
}

</mosaic_0001>

<llo_original>
// kernel: tpu_custom_call.1
$region0: #{tpu_custom_call.1}
  #allocation0 [shape = 'u32[]', space=smem, size = 0x4, offset = 0x4, fixed_abs, tag = 'smem constant byte address 0x4 - core index']
  #allocation1 [shape = 'u32[144,128]{1,0:T(1,128)}', space=vmem, size = 0x12000, scoped, tag = 'internal scratch']
  %s0 = inlined_call_operand.hbm [shape: f32[8,128], index: 0, kind: input, shape index: {}]
  %s1 = inlined_call_operand.hbm [shape: f32[8,128], index: 1, kind: output, shape index: {}]
  %s2 = sld [smem:[#allocation0]]
  $region18: #{tpu_custom_call.1} parent=0
    _
  %s4 = ssub.s32 1, %s2
  %s5 = scalar_select 0, %s4, %s2
  $region1: #{tpu_custom_call.1} parent=0
    #allocation2 [shape = 'u8[4096]{0}', space=vmem, size = 0x1000, scoped, tag = 'input window, operand 0, single buffered']
    #allocation3 [shape = 's32[1]{0}', space=sflag, size = 0x4, scoped, tag = 'scoped memory for tpu_custom_call.1']
    #allocation4 [shape = 's32[1]{0}', space=sflag, size = 0x4, scoped, tag = 'scoped memory for tpu_custom_call.1']
    #allocation5 [shape = 'u8[4096]{0}', space=vmem, size = 0x1000, scoped, tag = 'output window, operand 0, single buffered']
    %6 = vsyncpa [#allocation3], 0
    %7 = vsyncpa [#allocation4], 0
    // Predicated region
    $region2: #{tpu_custom_call.1} parent=1 // pred_check
      _
    $region3: #{tpu_custom_call.1} parent=1 // pred_check_branch
      %9 = sbr.rel (0) target = $region5
    $region4: #{tpu_custom_call.1} parent=1 // pred_region
      %s11 = ssub.s32 128, 128
      %12 = vsyncadd [#allocation3], %s11
      %s14 = sshll.u32 [#allocation2], 4
      %s15 = int_to_ptr.vmem [resolvable:$true] %s14
      %17 = dma.hbm_to_vmem [thread:$0]  %s0, 128, %s15, [#allocation3]
    $region5: #{tpu_custom_call.1} parent=1 // pred_fallthru
      _
    // Predicated region
    $region6: #{tpu_custom_call.1} parent=1 // pred_check
      _
    $region7: #{tpu_custom_call.1} parent=1 // pred_check_branch
      %19 = sbr.rel (0) target = $region9
    $region8: #{tpu_custom_call.1} parent=1 // pred_region
      %20 = dma.done [#allocation3], 128
    $region9: #{tpu_custom_call.1} parent=1 // pred_fallthru
      _
    %v21 = vld [vmem:[#allocation2] sm:$0xff]
    %22 = vadd.xlane.f32.xlu0 %v21
    %v23 = vpop.xlane.xlu0 %22
    %v24 = vrot.slane %v23, 4
    %v25 = vadd.f32 %v23, %v24
    %v26 = vrot.slane %v25, 2
    %v27 = vadd.f32 %v25, %v26
    %v28 = vrot.slane %v27, 1
    %v29 = vadd.f32 %v27, %v28
    %s30 = vtos %v29
    %s31 = smul.f32 %s30, 0.015625
    %v32 = vstv %s31
    %v33 = vsub.f32 %v21, %v32
    %34 = vst [vmem:[#allocation5] sm:$0xff] %v33
    // Predicated region
    $region10: #{tpu_custom_call.1} parent=1 // pred_check
      _
    $region11: #{tpu_custom_call.1} parent=1 // pred_check_branch
      %36 = sbr.rel (0) target = $region13
    $region12: #{tpu_custom_call.1} parent=1 // pred_region
      %s38 = ssub.s32 128, 128
      %39 = vsyncadd [#allocation4], %s38
      %s41 = sshll.u32 [#allocation5], 4
      %s42 = int_to_ptr.vmem [resolvable:$true] %s41
      %44 = dma.vmem_to_hbm [thread:$0]  %s42, 128, %s1, [#allocation4]
    $region13: #{tpu_custom_call.1} parent=1 // pred_fallthru
      _
    // Predicated region
    $region14: #{tpu_custom_call.1} parent=1 // pred_check
      _
    $region15: #{tpu_custom_call.1} parent=1 // pred_check_branch
      %46 = sbr.rel (0) target = $region17
    $region16: #{tpu_custom_call.1} parent=1 // pred_region
      %47 = dma.done [#allocation4], 128
    $region17: #{tpu_custom_call.1} parent=1 // pred_fallthru
      _
    %48 = vsyncpa [#allocation3], 1
    %49 = vsyncpa [#allocation4], 1

</llo_original>
